<compile_context>
chip_gen: v7x
topology: tpu7x:2x2x1
jax: 0.10.0
libtpu: 0.0.40
codegen_flags: <defaults>
</compile_context>

<pallas_src>
import functools

import numpy as np

import jax
import jax.numpy as jnp
from jax import lax
from jax.experimental import pallas as pl
from jax.experimental.pallas import tpu as pltpu


def _conv_block_kernel(x_ref, w_ref, m_ref, o_ref, patch_ref, *, W, eps):
    """One batch-chunk per grid step.

    x_ref:     (1, R, HW)         R = NB*C_in rows (image-major, channel-minor), f32
    w_ref:     (NB*C_out, Kp)     block-diagonal-in-batch tap weights, Kp >= 9*R (zero pad)
    m_ref:     (9, R, HW)         per-tap halo validity masks (compile-time constants)
    o_ref:     (1, NB*C_out, HW)  flattened output rows ordered (image, channel)
    patch_ref: (Kp, HW)           VMEM scratch patch slab
    """
    x2d = x_ref[0]                               # (R, HW)
    R, HW = x2d.shape
    Kp = patch_ref.shape[0]

    # Zero the contraction-padding rows once so the (zero-weight) matmul tail is defined.
    if Kp > 9 * R:
        patch_ref[pl.ds(9 * R, Kp - 9 * R), :] = jnp.zeros((Kp - 9 * R, HW), jnp.float32)

    for dy in (-1, 0, 1):
        for dx in (-1, 0, 1):
            t = (dy + 1) * 3 + (dx + 1)
            s = dy * W + dx
            # shifted[p] = x[p + s]; wrap-around lanes are exactly the out-of-bounds halo
            # taps and are zeroed by the static mask.
            shifted = x2d if s == 0 else pltpu.roll(x2d, (-s) % HW, axis=1)
            if not (dy == 0 and dx == 0):
                shifted = shifted * m_ref[t]          # pure elementwise, no broadcast
            patch_ref[pl.ds(t * R, R), :] = shifted    # one tap temporary live at a time

    # One small MXU matmul instead of 36 broadcast-FMAs on the VPU.
    acc = jnp.dot(w_ref[...], patch_ref[...],
                  preferred_element_type=jnp.float32)  # (NB*C_out, HW)

    # InstanceNorm2d (affine=False, biased variance) per (image, channel) row over HW.
    mean = jnp.mean(acc, axis=1, keepdims=True)
    centered = acc - mean
    var = jnp.mean(centered * centered, axis=1, keepdims=True)
    y = centered * lax.rsqrt(var + eps)

    # ReLU + lane-dense unmasked store (HW is a multiple of 128).
    o_ref[0] = jnp.maximum(y, 0.0).astype(o_ref.dtype)


def _halo_masks(H, W):
    """Static validity mask per tap: (9, H*W) float32, 1.0 where the tap is in-bounds."""
    HW = H * W
    p = np.arange(HW)
    yy, xx = p // W, p % W
    masks = np.empty((9, HW), np.float32)
    for dy in (-1, 0, 1):
        for dx in (-1, 0, 1):
            t = (dy + 1) * 3 + (dx + 1)
            valid = ((yy + dy >= 0) & (yy + dy < H) & (xx + dx >= 0) & (xx + dx < W))
            masks[t] = valid.astype(np.float32)
    return masks


def _tensorcores_per_chip():
    """2 on v7x (dual TensorCore); 1 on v5e/v6e (single TC, 'parallel' buys nothing)."""
    try:
        kind = jax.devices()[0].device_kind.lower()
    except Exception:
        return 1
    return 2 if ("v7" in kind or "tpu7" in kind) else 1


def conv_block_forward(x_nchw, weight, bias=None, *, eps=1e-5):
    """x_nchw: (N, C_in, H, W); weight: (C_out, C_in, 3, 3); bias cancels in InstanceNorm."""
    del bias  # Conv bias cancels exactly under InstanceNorm2d(affine=False).
    N, C_in, H, W = x_nchw.shape
    C_out = weight.shape[0]
    HW = H * W
    # TODO(synk): for general shapes pad HW up to a multiple of 128 in the wrapper so the
    # output store stays an unmasked, lane-dense vst.
    assert HW % 128 == 0, "keep the flattened spatial axis lane-dense"

    # Batch chunking: one grid step on single-TC chips; 2 parallel chunks on v7x.
    tc = _tensorcores_per_chip()
    n_chunks = tc if (N >= tc and N % tc == 0) else 1
    NB = N // n_chunks
    R = NB * C_in                      # sublane rows per step (8 on the single-TC path)
    K = 9 * R
    Kp = ((K + 7) // 8) * 8            # pad contraction dim to a sublane multiple

    # Free contiguous reshape: batch and channels stacked on the sublane axis.
    x_flat = x_nchw.astype(jnp.float32).reshape(n_chunks, R, HW)

    # Tap-major weights (t, o, c), then block-diagonal-in-batch expansion so a single
    # matmul yields output rows already ordered (image, channel).
    w9 = jnp.transpose(weight.astype(jnp.float32).reshape(C_out, C_in, 9), (2, 0, 1))
    eye = jnp.eye(NB, dtype=jnp.float32)
    w_big = jnp.einsum("toc,nm->notmc", w9, eye).reshape(NB * C_out, K)
    if Kp > K:
        w_big = jnp.pad(w_big, ((0, 0), (0, Kp - K)))

    # Compile-time halo masks, pre-expanded to (R, HW) per tap — no in-kernel broadcasts.
    masks = jnp.asarray(np.ascontiguousarray(
        np.broadcast_to(_halo_masks(H, W)[:, None, :], (9, R, HW))))

    kernel = functools.partial(_conv_block_kernel, W=W, eps=eps)

    out_flat = pl.pallas_call(
        kernel,
        out_shape=jax.ShapeDtypeStruct((n_chunks, NB * C_out, HW), jnp.float32),
        grid_spec=pltpu.PrefetchScalarGridSpec(
            num_scalar_prefetch=0,
            grid=(n_chunks,),
            in_specs=[
                pl.BlockSpec((1, R, HW), lambda g: (g, 0, 0)),
                pl.BlockSpec((NB * C_out, Kp), lambda g: (0, 0)),       # resident
                pl.BlockSpec((9, R, HW), lambda g: (0, 0, 0)),          # resident
            ],
            out_specs=pl.BlockSpec((1, NB * C_out, HW), lambda g: (g, 0, 0)),
            scratch_shapes=[pltpu.VMEM((Kp, HW), jnp.float32)],
        ),
        compiler_params=pltpu.CompilerParams(
            dimension_semantics=("parallel",)),
    )(x_flat, w_big, masks)

    # Free contiguous reshape back to PyTorch's NCHW.
    return out_flat.reshape(N, C_out, H, W)


def _reference(x_nchw, weight, bias, eps=1e-5):
    """Plain-JAX reference reproducing the PyTorch forward (bias included)."""
    y = lax.conv_general_dilated(
        x_nchw.astype(jnp.float32), weight.astype(jnp.float32),
        window_strides=(1, 1), padding=((1, 1), (1, 1)),
        dimension_numbers=("NCHW", "OIHW", "NCHW"))
    y = y + bias.reshape(1, -1, 1, 1)
    mean = jnp.mean(y, axis=(2, 3), keepdims=True)
    var = jnp.mean((y - mean) ** 2, axis=(2, 3), keepdims=True)
    y = (y - mean) * lax.rsqrt(var + eps)
    return jnp.maximum(y, 0.0)


if __name__ == "__main__":
    # Small shapes consistent with the module: batch=2, in_c=4, out_c=8, 16x16.
    key = jax.random.PRNGKey(0)
    k_x, k_w, k_b = jax.random.split(key, 3)

    N, C_in, C_out, H, W = 2, 4, 8, 16, 16
    x = jax.random.normal(k_x, (N, C_in, H, W), dtype=jnp.float32)

    # Deterministic parameter init (Conv2d weight (out_c, in_c, 3, 3), bias (out_c,)).
    fan_in = C_in * 3 * 3
    bound = 1.0 / (fan_in ** 0.5)
    weight = jax.random.uniform(k_w, (C_out, C_in, 3, 3), jnp.float32, -bound, bound)
    bias = jax.random.uniform(k_b, (C_out,), jnp.float32, -bound, bound)

    out = conv_block_forward(x, weight, bias)
    out = jax.block_until_ready(out)

    ref = _reference(x, weight, bias)
    assert out.shape == (N, C_out, H, W)
    assert jnp.allclose(out, ref, atol=1e-4, rtol=1e-4)

    print("KERNEL_OK")
</pallas_src>

<mosaic_0001>
module attributes {stable_mosaic.version = 11 : i64} {
  func.func @_conv_block_kernel(%arg0: i32, %arg1: memref<1x8x256xf32, #tpu.memory_space<vmem>>, %arg2: memref<16x72xf32, #tpu.memory_space<vmem>>, %arg3: memref<9x8x256xf32, #tpu.memory_space<vmem>>, %arg4: memref<1x16x256xf32, #tpu.memory_space<vmem>>, %arg5: memref<72x256xf32, #tpu.memory_space<vmem>>) attributes {dimension_semantics = [#tpu.dimension_semantics<parallel>], iteration_bounds = array<i64: 1>, scalar_prefetch = 0 : i64, scratch_operands = 1 : i64, tpu.core_type = #tpu.core_type<tc>, window_params = [{transform_indices = @transform_0, window_bounds = array<i64: 1, 8, 256>}, {pipeline_mode = #tpu.pipeline_mode<synchronous>, transform_indices = @transform_1, window_bounds = array<i64: 16, 72>}, {pipeline_mode = #tpu.pipeline_mode<synchronous>, transform_indices = @transform_2, window_bounds = array<i64: 9, 8, 256>}, {transform_indices = @transform_3, window_bounds = array<i64: 1, 16, 256>}]} {
    %c0 = arith.constant 0 : index
    %c0_0 = arith.constant 0 : index
    %c0_1 = arith.constant 0 : index
    %0 = vector.load %arg1[%c0, %c0_0, %c0_1] : memref<1x8x256xf32, #tpu.memory_space<vmem>>, vector<1x8x256xf32>
    %1 = vector.shape_cast %0 : vector<1x8x256xf32> to vector<8x256xf32>
    %c17_i32 = arith.constant 17 : i32
    %2 = tpu.dynamic_rotate %1 by %c17_i32 dim 1 : vector<8x256xf32>, i32 -> vector<8x256xf32>
    %c0_2 = arith.constant 0 : index
    %c0_3 = arith.constant 0 : index
    %c0_4 = arith.constant 0 : index
    %3 = vector.load %arg3[%c0_2, %c0_3, %c0_4] : memref<9x8x256xf32, #tpu.memory_space<vmem>>, vector<1x8x256xf32>
    %4 = vector.shape_cast %3 : vector<1x8x256xf32> to vector<8x256xf32>
    %5 = arith.mulf %2, %4 : vector<8x256xf32>
    %c0_5 = arith.constant 0 : index
    %c0_6 = arith.constant 0 : index
    %6 = vector.load %arg5[%c0_5, %c0_6] : memref<72x256xf32, #tpu.memory_space<vmem>>, vector<8x256xf32>
    tpu.vector_store %arg5[%c0_5, %c0_6], %5 {strides = array<i32>} : memref<72x256xf32, #tpu.memory_space<vmem>>, vector<8x256xf32>,
    %c16_i32 = arith.constant 16 : i32
    %7 = tpu.dynamic_rotate %1 by %c16_i32 dim 1 : vector<8x256xf32>, i32 -> vector<8x256xf32>
    %c1 = arith.constant 1 : index
    %c0_7 = arith.constant 0 : index
    %c0_8 = arith.constant 0 : index
    %8 = vector.load %arg3[%c1, %c0_7, %c0_8] : memref<9x8x256xf32, #tpu.memory_space<vmem>>, vector<1x8x256xf32>
    %9 = vector.shape_cast %8 : vector<1x8x256xf32> to vector<8x256xf32>
    %10 = arith.mulf %7, %9 : vector<8x256xf32>
    %c8 = arith.constant 8 : index
    %c0_9 = arith.constant 0 : index
    %11 = vector.load %arg5[%c8, %c0_9] : memref<72x256xf32, #tpu.memory_space<vmem>>, vector<8x256xf32>
    tpu.vector_store %arg5[%c8, %c0_9], %10 {strides = array<i32>} : memref<72x256xf32, #tpu.memory_space<vmem>>, vector<8x256xf32>,
    %c15_i32 = arith.constant 15 : i32
    %12 = tpu.dynamic_rotate %1 by %c15_i32 dim 1 : vector<8x256xf32>, i32 -> vector<8x256xf32>
    %c2 = arith.constant 2 : index
    %c0_10 = arith.constant 0 : index
    %c0_11 = arith.constant 0 : index
    %13 = vector.load %arg3[%c2, %c0_10, %c0_11] : memref<9x8x256xf32, #tpu.memory_space<vmem>>, vector<1x8x256xf32>
    %14 = vector.shape_cast %13 : vector<1x8x256xf32> to vector<8x256xf32>
    %15 = arith.mulf %12, %14 : vector<8x256xf32>
    %c16 = arith.constant 16 : index
    %c0_12 = arith.constant 0 : index
    %16 = vector.load %arg5[%c16, %c0_12] : memref<72x256xf32, #tpu.memory_space<vmem>>, vector<8x256xf32>
    tpu.vector_store %arg5[%c16, %c0_12], %15 {strides = array<i32>} : memref<72x256xf32, #tpu.memory_space<vmem>>, vector<8x256xf32>,
    %c1_i32 = arith.constant 1 : i32
    %17 = tpu.dynamic_rotate %1 by %c1_i32 dim 1 : vector<8x256xf32>, i32 -> vector<8x256xf32>
    %c3 = arith.constant 3 : index
    %c0_13 = arith.constant 0 : index
    %c0_14 = arith.constant 0 : index
    %18 = vector.load %arg3[%c3, %c0_13, %c0_14] : memref<9x8x256xf32, #tpu.memory_space<vmem>>, vector<1x8x256xf32>
    %19 = vector.shape_cast %18 : vector<1x8x256xf32> to vector<8x256xf32>
    %20 = arith.mulf %17, %19 : vector<8x256xf32>
    %c24 = arith.constant 24 : index
    %c0_15 = arith.constant 0 : index
    %21 = vector.load %arg5[%c24, %c0_15] : memref<72x256xf32, #tpu.memory_space<vmem>>, vector<8x256xf32>
    tpu.vector_store %arg5[%c24, %c0_15], %20 {strides = array<i32>} : memref<72x256xf32, #tpu.memory_space<vmem>>, vector<8x256xf32>,
    %c32 = arith.constant 32 : index
    %c0_16 = arith.constant 0 : index
    %22 = vector.load %arg5[%c32, %c0_16] : memref<72x256xf32, #tpu.memory_space<vmem>>, vector<8x256xf32>
    tpu.vector_store %arg5[%c32, %c0_16], %1 {strides = array<i32>} : memref<72x256xf32, #tpu.memory_space<vmem>>, vector<8x256xf32>,
    %c255_i32 = arith.constant 255 : i32
    %23 = tpu.dynamic_rotate %1 by %c255_i32 dim 1 : vector<8x256xf32>, i32 -> vector<8x256xf32>
    %c5 = arith.constant 5 : index
    %c0_17 = arith.constant 0 : index
    %c0_18 = arith.constant 0 : index
    %24 = vector.load %arg3[%c5, %c0_17, %c0_18] : memref<9x8x256xf32, #tpu.memory_space<vmem>>, vector<1x8x256xf32>
    %25 = vector.shape_cast %24 : vector<1x8x256xf32> to vector<8x256xf32>
    %26 = arith.mulf %23, %25 : vector<8x256xf32>
    %c40 = arith.constant 40 : index
    %c0_19 = arith.constant 0 : index
    %27 = vector.load %arg5[%c40, %c0_19] : memref<72x256xf32, #tpu.memory_space<vmem>>, vector<8x256xf32>
    tpu.vector_store %arg5[%c40, %c0_19], %26 {strides = array<i32>} : memref<72x256xf32, #tpu.memory_space<vmem>>, vector<8x256xf32>,
    %c241_i32 = arith.constant 241 : i32
    %28 = tpu.dynamic_rotate %1 by %c241_i32 dim 1 : vector<8x256xf32>, i32 -> vector<8x256xf32>
    %c6 = arith.constant 6 : index
    %c0_20 = arith.constant 0 : index
    %c0_21 = arith.constant 0 : index
    %29 = vector.load %arg3[%c6, %c0_20, %c0_21] : memref<9x8x256xf32, #tpu.memory_space<vmem>>, vector<1x8x256xf32>
    %30 = vector.shape_cast %29 : vector<1x8x256xf32> to vector<8x256xf32>
    %31 = arith.mulf %28, %30 : vector<8x256xf32>
    %c48 = arith.constant 48 : index
    %c0_22 = arith.constant 0 : index
    %32 = vector.load %arg5[%c48, %c0_22] : memref<72x256xf32, #tpu.memory_space<vmem>>, vector<8x256xf32>
    tpu.vector_store %arg5[%c48, %c0_22], %31 {strides = array<i32>} : memref<72x256xf32, #tpu.memory_space<vmem>>, vector<8x256xf32>,
    %c240_i32 = arith.constant 240 : i32
    %33 = tpu.dynamic_rotate %1 by %c240_i32 dim 1 : vector<8x256xf32>, i32 -> vector<8x256xf32>
    %c7 = arith.constant 7 : index
    %c0_23 = arith.constant 0 : index
    %c0_24 = arith.constant 0 : index
    %34 = vector.load %arg3[%c7, %c0_23, %c0_24] : memref<9x8x256xf32, #tpu.memory_space<vmem>>, vector<1x8x256xf32>
    %35 = vector.shape_cast %34 : vector<1x8x256xf32> to vector<8x256xf32>
    %36 = arith.mulf %33, %35 : vector<8x256xf32>
    %c56 = arith.constant 56 : index
    %c0_25 = arith.constant 0 : index
    %37 = vector.load %arg5[%c56, %c0_25] : memref<72x256xf32, #tpu.memory_space<vmem>>, vector<8x256xf32>
    tpu.vector_store %arg5[%c56, %c0_25], %36 {strides = array<i32>} : memref<72x256xf32, #tpu.memory_space<vmem>>, vector<8x256xf32>,
    %c239_i32 = arith.constant 239 : i32
    %38 = tpu.dynamic_rotate %1 by %c239_i32 dim 1 : vector<8x256xf32>, i32 -> vector<8x256xf32>
    %c8_26 = arith.constant 8 : index
    %c0_27 = arith.constant 0 : index
    %c0_28 = arith.constant 0 : index
    %39 = vector.load %arg3[%c8_26, %c0_27, %c0_28] : memref<9x8x256xf32, #tpu.memory_space<vmem>>, vector<1x8x256xf32>
    %40 = vector.shape_cast %39 : vector<1x8x256xf32> to vector<8x256xf32>
    %41 = arith.mulf %38, %40 : vector<8x256xf32>
    %c64 = arith.constant 64 : index
    %c0_29 = arith.constant 0 : index
    %42 = vector.load %arg5[%c64, %c0_29] : memref<72x256xf32, #tpu.memory_space<vmem>>, vector<8x256xf32>
    tpu.vector_store %arg5[%c64, %c0_29], %41 {strides = array<i32>} : memref<72x256xf32, #tpu.memory_space<vmem>>, vector<8x256xf32>,
    %c0_30 = arith.constant 0 : index
    %c0_31 = arith.constant 0 : index
    %43 = vector.load %arg2[%c0_30, %c0_31] : memref<16x72xf32, #tpu.memory_space<vmem>>, vector<16x72xf32>
    %c0_32 = arith.constant 0 : index
    %c0_33 = arith.constant 0 : index
    %44 = vector.load %arg5[%c0_32, %c0_33] : memref<72x256xf32, #tpu.memory_space<vmem>>, vector<72x256xf32>
    %cst = arith.constant dense<0.000000e+00> : vector<16x256xf32>
    %45 = tpu.matmul %43, %44, %cst {dimension_numbers = #tpu.dot_dimension_numbers<[1], [0], [0], [1], [0, 0, 1, 1], [], []>} : vector<16x72xf32>, vector<72x256xf32>, vector<16x256xf32> -> vector<16x256xf32>
    %cst_34 = arith.constant dense<0.000000e+00> : vector<16xf32>
    %46 = vector.multi_reduction <add>, %45, %cst_34 [1] : vector<16x256xf32> to vector<16xf32>
    %47 = vector.shape_cast %46 : vector<16xf32> to vector<16x1xf32>
    %cst_35 = arith.constant 2.560000e+02 : f32
    %48 = vector.broadcast %cst_35 : f32 to vector<16x1xf32>
    %49 = arith.divf %47, %48 : vector<16x1xf32>
    %50 = vector.broadcast %49 : vector<16x1xf32> to vector<16x256xf32>
    %51 = arith.subf %45, %50 : vector<16x256xf32>
    %52 = arith.mulf %51, %51 : vector<16x256xf32>
    %cst_36 = arith.constant dense<0.000000e+00> : vector<16xf32>
    %53 = vector.multi_reduction <add>, %52, %cst_36 [1] : vector<16x256xf32> to vector<16xf32>
    %54 = vector.shape_cast %53 : vector<16xf32> to vector<16x1xf32>
    %cst_37 = arith.constant 2.560000e+02 : f32
    %55 = vector.broadcast %cst_37 : f32 to vector<16x1xf32>
    %56 = arith.divf %54, %55 : vector<16x1xf32>
    %cst_38 = arith.constant 9.99999974E-6 : f32
    %57 = vector.broadcast %cst_38 : f32 to vector<16x1xf32>
    %58 = arith.addf %56, %57 : vector<16x1xf32>
    %59 = math.rsqrt %58 : vector<16x1xf32>
    %60 = vector.broadcast %59 : vector<16x1xf32> to vector<16x256xf32>
    %61 = arith.mulf %51, %60 : vector<16x256xf32>
    %cst_39 = arith.constant 0.000000e+00 : f32
    %62 = vector.broadcast %cst_39 : f32 to vector<16x256xf32>
    %63 = arith.maximumf %61, %62 : vector<16x256xf32>
    %c0_40 = arith.constant 0 : index
    %c0_41 = arith.constant 0 : index
    %c0_42 = arith.constant 0 : index
    %64 = vector.load %arg4[%c0_40, %c0_41, %c0_42] : memref<1x16x256xf32, #tpu.memory_space<vmem>>, vector<1x16x256xf32>
    %65 = vector.shape_cast %64 : vector<1x16x256xf32> to vector<16x256xf32>
    %66 = vector.shape_cast %63 : vector<16x256xf32> to vector<1x16x256xf32>
    tpu.vector_store %arg4[%c0_40, %c0_41, %c0_42], %66 {strides = array<i32>} : memref<1x16x256xf32, #tpu.memory_space<vmem>>, vector<1x16x256xf32>,
    return
  }
  func.func @transform_0(%arg0: i32) -> (i32, i32, i32) {
    %c0_i32 = arith.constant 0 : i32
    %c0_i32_0 = arith.constant 0 : i32
    %c0_i32_1 = arith.constant 0 : i32
    return %arg0, %c0_i32, %c0_i32_0 : i32, i32, i32
  }
  func.func @transform_1(%arg0: i32) -> (i32, i32) {
    %c0_i32 = arith.constant 0 : i32
    %c0_i32_0 = arith.constant 0 : i32
    %c0_i32_1 = arith.constant 0 : i32
    return %c0_i32, %c0_i32_0 : i32, i32
  }
  func.func @transform_2(%arg0: i32) -> (i32, i32, i32) {
    %c0_i32 = arith.constant 0 : i32
    %c0_i32_0 = arith.constant 0 : i32
    %c0_i32_1 = arith.constant 0 : i32
    %c0_i32_2 = arith.constant 0 : i32
    return %c0_i32, %c0_i32_0, %c0_i32_1 : i32, i32, i32
  }
  func.func @transform_3(%arg0: i32) -> (i32, i32, i32) {
    %c0_i32 = arith.constant 0 : i32
    %c0_i32_0 = arith.constant 0 : i32
    %c0_i32_1 = arith.constant 0 : i32
    return %arg0, %c0_i32, %c0_i32_0 : i32, i32, i32
  }
}

</mosaic_0001>

<llo_original>
// kernel: tpu_custom_call.1
$region0: #{tpu_custom_call.1}
  #allocation0 [shape = 'u32[]', space=smem, size = 0x4, offset = 0x4, fixed_abs, tag = 'smem constant byte address 0x4 - core index']
  #allocation1 [shape = 'u32[144,128]{1,0:T(1,128)}', space=vmem, size = 0x12000, scoped, tag = 'internal scratch']
  #allocation2 [shape = 'f32[72,256]{1,0:T(8,128)}', space=vmem, size = 0x12000, scoped, tag = 'scratch operand']
  %s0 = inlined_call_operand.hbm [shape: f32[1,8,256], index: 0, kind: input, shape index: {}]
  %s1 = inlined_call_operand.hbm [shape: f32[16,72], index: 1, kind: input, shape index: {}]
  %s2 = inlined_call_operand.hbm [shape: f32[9,8,256], index: 2, kind: input, shape index: {}]
  %s3 = inlined_call_operand.hbm [shape: f32[1,16,256], index: 3, kind: output, shape index: {}]
  %s4 = sld [smem:[#allocation0]]
  $region34: #{tpu_custom_call.1} parent=0
    _
  %s6 = ssub.s32 1, %s4
  %s7 = scalar_select 0, %s6, %s4
  $region1: #{tpu_custom_call.1} parent=0
    #allocation3 [shape = 'u8[8192]{0}', space=vmem, size = 0x2000, scoped, tag = 'input window, operand 0, single buffered']
    #allocation4 [shape = 's32[1]{0}', space=sflag, size = 0x4, scoped, tag = 'scoped memory for tpu_custom_call.1']
    #allocation5 [shape = 's32[1]{0}', space=sflag, size = 0x4, scoped, tag = 'scoped memory for tpu_custom_call.1']
    #allocation6 [shape = 'u8[8192]{0}', space=vmem, size = 0x2000, scoped, tag = 'input window, operand 1, single buffered']
    #allocation7 [shape = 's32[1]{0}', space=sflag, size = 0x4, scoped, tag = 'scoped memory for tpu_custom_call.1']
    #allocation8 [shape = 'u8[73728]{0}', space=vmem, size = 0x12000, scoped, tag = 'input window, operand 2, single buffered']
    #allocation9 [shape = 'u8[16384]{0}', space=vmem, size = 0x4000, scoped, tag = 'output window, operand 0, single buffered']
    %8 = vsyncpa [#allocation4], 0
    %9 = vsyncpa [#allocation7], 0
    %10 = vsyncpa [#allocation5], 0
    // Predicated region
    $region2: #{tpu_custom_call.1} parent=1 // pred_check
      _
    $region3: #{tpu_custom_call.1} parent=1 // pred_check_branch
      %12 = sbr.rel (0) target = $region5
    $region4: #{tpu_custom_call.1} parent=1 // pred_region
      %s14 = ssub.s32 256, 256
      %15 = vsyncadd [#allocation4], %s14
      %s17 = sshll.u32 [#allocation3], 4
      %s18 = int_to_ptr.vmem [resolvable:$true] %s17
      %20 = dma.hbm_to_vmem [thread:$0]  %s0, 256, %s18, [#allocation4]
    $region5: #{tpu_custom_call.1} parent=1 // pred_fallthru
      _
    // Predicated region
    $region6: #{tpu_custom_call.1} parent=1 // pred_check
      _
    $region7: #{tpu_custom_call.1} parent=1 // pred_check_branch
      %22 = sbr.rel (0) target = $region9
    $region8: #{tpu_custom_call.1} parent=1 // pred_region
      %s24 = ssub.s32 256, 256
      %25 = vsyncadd [#allocation7], %s24
      %s26 = sshll.u32 [#allocation6], 4
      %s27 = int_to_ptr.vmem [resolvable:$true] %s26
      %32 = dma.hbm_to_vmem [thread:$0]  %s1, 256, %s27, [#allocation7], 128, 128, 8
    $region9: #{tpu_custom_call.1} parent=1 // pred_fallthru
      _
    // Predicated region
    $region10: #{tpu_custom_call.1} parent=1 // pred_check
      _
    $region11: #{tpu_custom_call.1} parent=1 // pred_check_branch
      %34 = sbr.rel (0) target = $region13
    $region12: #{tpu_custom_call.1} parent=1 // pred_region
      %s36 = ssub.s32 2304, 2304
      %37 = vsyncadd [#allocation7], %s36
      %s38 = sshll.u32 [#allocation8], 4
      %s39 = int_to_ptr.vmem [resolvable:$true] %s38
      %44 = dma.hbm_to_vmem [thread:$0]  %s2, 2304, %s39, [#allocation7], 256, 256, 16
    $region13: #{tpu_custom_call.1} parent=1 // pred_fallthru
      _
    // Predicated region
    $region14: #{tpu_custom_call.1} parent=1 // pred_check
      _
    $region15: #{tpu_custom_call.1} parent=1 // pred_check_branch
      %46 = sbr.rel (0) target = $region17
    $region16: #{tpu_custom_call.1} parent=1 // pred_region
      %47 = dma.done [#allocation4], 256
    $region17: #{tpu_custom_call.1} parent=1 // pred_fallthru
      _
    // Predicated region
    $region18: #{tpu_custom_call.1} parent=1 // pred_check
      _
    $region19: #{tpu_custom_call.1} parent=1 // pred_check_branch
      %49 = sbr.rel (0) target = $region21
    $region20: #{tpu_custom_call.1} parent=1 // pred_region
      %50 = dma.done [#allocation7], 256
    $region21: #{tpu_custom_call.1} parent=1 // pred_fallthru
      _
    // Predicated region
    $region22: #{tpu_custom_call.1} parent=1 // pred_check
      _
    $region23: #{tpu_custom_call.1} parent=1 // pred_check_branch
      %52 = sbr.rel (0) target = $region25
    $region24: #{tpu_custom_call.1} parent=1 // pred_region
      %53 = dma.done [#allocation7], 2304
    $region25: #{tpu_custom_call.1} parent=1 // pred_fallthru
      _
    %v54 = vld [vmem:[#allocation3] sm:$0xff]
    %v55 = vld [vmem:[#allocation3 + $0x8] sm:$0xff]
    %56 = vrot.lane.b32.xlu0 %v54, 17
    %v57 = vpop.permute.xlu0 %56
    %58 = vrot.lane.b32.xlu0 %v55, 17
    %v59 = vpop.permute.xlu0 %58
    %v60 = vlaneseq
    %v61 = vand.u32 %v60, 127
    %vm62 = vcmp.lt.s32.totalorder %v61, 17
    %v63 = vsel %vm62, %v57, %v59
    %v64 = vsel %vm62, %v59, %v57
    %v65 = vld [vmem:[#allocation8] sm:$0xff]
    %v66 = vld [vmem:[#allocation8 + $0x8] sm:$0xff]
    %v67 = vmul.f32 %v64, %v65
    %v68 = vmul.f32 %v63, %v66
    %69 = vst [vmem:[#allocation2] sm:$0xff] %v67
    %70 = vst [vmem:[#allocation2 + $0x8] sm:$0xff] %v68
    %71 = vrot.lane.b32.xlu0 %v54, 16
    %v72 = vpop.permute.xlu0 %71
    %73 = vrot.lane.b32.xlu0 %v55, 16
    %v74 = vpop.permute.xlu0 %73
    %vm75 = vcmp.lt.s32.totalorder %v61, 16
    %v76 = vsel %vm75, %v72, %v74
    %v77 = vsel %vm75, %v74, %v72
    %s78 = scalar_lea.vmem [#allocation8], 16
    %v79 = vld [vmem:[%s78] sm:$0xff]
    %v80 = vld [vmem:[%s78 + $0x8] sm:$0xff]
    %v81 = vmul.f32 %v77, %v79
    %v82 = vmul.f32 %v76, %v80
    %83 = vst [vmem:[#allocation2 + $0x10] sm:$0xff] %v81
    %84 = vst [vmem:[#allocation2 + $0x18] sm:$0xff] %v82
    %85 = vrot.lane.b32.xlu0 %v54, 15
    %v86 = vpop.permute.xlu0 %85
    %87 = vrot.lane.b32.xlu0 %v55, 15
    %v88 = vpop.permute.xlu0 %87
    %vm89 = vcmp.lt.s32.totalorder %v61, 15
    %v90 = vsel %vm89, %v86, %v88
    %v91 = vsel %vm89, %v88, %v86
    %s92 = scalar_lea.vmem [#allocation8], 32
    %v93 = vld [vmem:[%s92] sm:$0xff]
    %v94 = vld [vmem:[%s92 + $0x8] sm:$0xff]
    %v95 = vmul.f32 %v91, %v93
    %v96 = vmul.f32 %v90, %v94
    %97 = vst [vmem:[#allocation2 + $0x20] sm:$0xff] %v95
    %98 = vst [vmem:[#allocation2 + $0x28] sm:$0xff] %v96
    %99 = vrot.lane.b32.xlu0 %v54, 1
    %v100 = vpop.permute.xlu0 %99
    %101 = vrot.lane.b32.xlu0 %v55, 1
    %v102 = vpop.permute.xlu0 %101
    %vm103 = vcmp.lt.s32.totalorder %v61, 1
    %v104 = vsel %vm103, %v100, %v102
    %v105 = vsel %vm103, %v102, %v100
    %s106 = scalar_lea.vmem [#allocation8], 48
    %v107 = vld [vmem:[%s106] sm:$0xff]
    %v108 = vld [vmem:[%s106 + $0x8] sm:$0xff]
    %v109 = vmul.f32 %v105, %v107
    %v110 = vmul.f32 %v104, %v108
    %111 = vst [vmem:[#allocation2 + $0x30] sm:$0xff] %v109
    %112 = vst [vmem:[#allocation2 + $0x38] sm:$0xff] %v110
    %113 = vst [vmem:[#allocation2 + $0x40] sm:$0xff] %v54
    %114 = vst [vmem:[#allocation2 + $0x48] sm:$0xff] %v55
    %115 = vrot.lane.b32.xlu0 %v54, 127
    %v116 = vpop.permute.xlu0 %115
    %117 = vrot.lane.b32.xlu0 %v55, 127
    %v118 = vpop.permute.xlu0 %117
    %vm119 = vcmp.lt.s32.totalorder %v61, 127
    %v120 = vsel %vm119, %v116, %v118
    %v121 = vsel %vm119, %v118, %v116
    %s122 = scalar_lea.vmem [#allocation8], 80
    %v123 = vld [vmem:[%s122] sm:$0xff]
    %v124 = vld [vmem:[%s122 + $0x8] sm:$0xff]
    %v125 = vmul.f32 %v120, %v123
    %v126 = vmul.f32 %v121, %v124
    %127 = vst [vmem:[#allocation2 + $0x50] sm:$0xff] %v125
    %128 = vst [vmem:[#allocation2 + $0x58] sm:$0xff] %v126
    %129 = vrot.lane.b32.xlu0 %v54, 113
    %v130 = vpop.permute.xlu0 %129
    %131 = vrot.lane.b32.xlu0 %v55, 113
    %v132 = vpop.permute.xlu0 %131
    %vm133 = vcmp.lt.s32.totalorder %v61, 113
    %v134 = vsel %vm133, %v130, %v132
    %v135 = vsel %vm133, %v132, %v130
    %s136 = scalar_lea.vmem [#allocation8], 96
    %v137 = vld [vmem:[%s136] sm:$0xff]
    %v138 = vld [vmem:[%s136 + $0x8] sm:$0xff]
    %v139 = vmul.f32 %v134, %v137
    %v140 = vmul.f32 %v135, %v138
    %141 = vst [vmem:[#allocation2 + $0x60] sm:$0xff] %v139
    %142 = vst [vmem:[#allocation2 + $0x68] sm:$0xff] %v140
    %143 = vrot.lane.b32.xlu0 %v54, 112
    %v144 = vpop.permute.xlu0 %143
    %145 = vrot.lane.b32.xlu0 %v55, 112
    %v146 = vpop.permute.xlu0 %145
    %vm147 = vcmp.lt.s32.totalorder %v61, 112
    %v148 = vsel %vm147, %v144, %v146
    %v149 = vsel %vm147, %v146, %v144
    %s150 = scalar_lea.vmem [#allocation8], 112
    %v151 = vld [vmem:[%s150] sm:$0xff]
    %v152 = vld [vmem:[%s150 + $0x8] sm:$0xff]
    %v153 = vmul.f32 %v148, %v151
    %v154 = vmul.f32 %v149, %v152
    %155 = vst [vmem:[#allocation2 + $0x70] sm:$0xff] %v153
    %156 = vst [vmem:[#allocation2 + $0x78] sm:$0xff] %v154
    %157 = vrot.lane.b32.xlu0 %v54, 111
    %v158 = vpop.permute.xlu0 %157
    %159 = vrot.lane.b32.xlu0 %v55, 111
    %v160 = vpop.permute.xlu0 %159
    %vm161 = vcmp.lt.s32.totalorder %v61, 111
    %v162 = vsel %vm161, %v158, %v160
    %v163 = vsel %vm161, %v160, %v158
    %s164 = scalar_lea.vmem [#allocation8], 128
    %v165 = vld [vmem:[%s164] sm:$0xff]
    %v166 = vld [vmem:[%s164 + $0x8] sm:$0xff]
    %v167 = vmul.f32 %v162, %v165
    %v168 = vmul.f32 %v163, %v166
    %169 = vst [vmem:[#allocation2 + $0x80] sm:$0xff] %v167
    %170 = vst [vmem:[#allocation2 + $0x88] sm:$0xff] %v168
    %v171 = vld [vmem:[#allocation6] sm:$0xff]
    %v172 = vld [vmem:[#allocation6 + $0x8] sm:$0xff]
    %v173 = vld [vmem:[#allocation2] sm:$0xff]
    %v174 = vld [vmem:[#allocation2 + $0x8] sm:$0xff]
    %v175 = vld [vmem:[#allocation2 + $0x10] sm:$0xff]
    %v176 = vld [vmem:[#allocation2 + $0x18] sm:$0xff]
    %v177 = vld [vmem:[#allocation2 + $0x20] sm:$0xff]
    %v178 = vld [vmem:[#allocation2 + $0x28] sm:$0xff]
    %v179 = vld [vmem:[#allocation2 + $0x30] sm:$0xff]
    %v180 = vld [vmem:[#allocation2 + $0x38] sm:$0xff]
    %v181 = vld [vmem:[#allocation2 + $0x40] sm:$0xff]
    %v182 = vld [vmem:[#allocation2 + $0x48] sm:$0xff]
    %v183 = vld [vmem:[#allocation2 + $0x50] sm:$0xff]
    %v184 = vld [vmem:[#allocation2 + $0x58] sm:$0xff]
    %v185 = vld [vmem:[#allocation2 + $0x60] sm:$0xff]
    %v186 = vld [vmem:[#allocation2 + $0x68] sm:$0xff]
    %v187 = vld [vmem:[#allocation2 + $0x70] sm:$0xff]
    %v188 = vld [vmem:[#allocation2 + $0x78] sm:$0xff]
    %v189 = vld [vmem:[#allocation2 + $0x80] sm:$0xff]
    %v190 = vld [vmem:[#allocation2 + $0x88] sm:$0xff]
    %vm191 = vcmask 588800
    %v193 = vsel %vm191, %v171, 0
    %v196 = vsel %vm191, %v172, 0
    %198 = vmatprep.subr.mxu0 %v174
    %199 = vmatpush1.msra.mxu0 %v173
    %200 = vmatprep.subr.mxu0 %v176
    %201 = vmatpush1.msra.mxu0 %v175
    %202 = vmatprep.subr.mxu0 %v178
    %203 = vmatpush1.msra.mxu0 %v177
    %204 = vmatprep.subr.mxu0 %v180
    %205 = vmatpush1.msra.mxu0 %v179
    %206 = vmatprep.subr.mxu0 %v182
    %207 = vmatpush1.msra.mxu0 %v181
    %208 = vmatprep.subr.mxu0 %v184
    %209 = vmatpush1.msra.mxu0 %v183
    %210 = vmatprep.subr.mxu0 %v186
    %211 = vmatpush1.msra.mxu0 %v185
    %212 = vmatprep.subr.mxu0 %v188
    %213 = vmatpush1.msra.mxu0 %v187
    %214 = vmatprep.subr.mxu0 %v190
    %215 = vmatpush1.msra.mxu0 %v189
    %216 = vmatprep.subr.mxu0 0.0
    %217 = vmatpush1.msra.mxu0 0.0
    %218 = vmatprep.subr.mxu0 0.0
    %219 = vmatpush1.msra.mxu0 0.0
    %220 = vmatprep.subr.mxu0 0.0
    %221 = vmatpush1.msra.mxu0 0.0
    %222 = vmatprep.subr.mxu0 0.0
    %223 = vmatpush1.msra.mxu0 0.0
    %224 = vmatprep.subr.mxu0 0.0
    %225 = vmatpush1.msra.mxu0 0.0
    %226 = vmatprep.subr.mxu0 0.0
    %227 = vmatpush1.msra.mxu0 0.0
    %228 = vmatprep.subr.mxu0 0.0
    %229 = vmatpush1.msra.mxu0 0.0
    %230 = vmatprep.subr.mxu0 0.0
    %231 = vmatpush1.msra.mxu0 0.0
    %232 = vmatprep.subr.mxu0 0.0
    %233 = vmatpush1.msra.mxu0 0.0
    %234 = vmatprep.subr.mxu0 0.0
    %235 = vmatpush1.msra.mxu0 0.0
    %236 = vmatprep.subr.mxu0 0.0
    %237 = vmatpush1.msra.mxu0 0.0
    %238 = vmatprep.subr.mxu0 0.0
    %239 = vmatpush1.msra.mxu0 0.0
    %240 = vmatprep.subr.mxu0 0.0
    %241 = vmatpush1.msra.mxu0 0.0
    %242 = vmatprep.subr.mxu0 0.0
    %243 = vmatpush1.msra.mxu0 0.0
    %244 = vmatprep.subr.mxu0 0.0
    %245 = vmatpush1.msra.mxu0 0.0
    %246 = vmatprep.subr.mxu0 0.0
    %247 = vmatpush1.msra.mxu0 0.0
    %248 = vmatprep.subr.mxu0 0.0
    %249 = vmatpush1.msra.mxu0 0.0
    %250 = vmatprep.subr.mxu0 0.0
    %251 = vmatpush1.msra.mxu0 0.0
    %252 = vmatprep.subr.mxu0 0.0
    %253 = vmatpush1.msra.mxu0 0.0
    %254 = vmatprep.subr.mxu0 0.0
    %255 = vmatpush1.msra.mxu0 0.0
    %256 = vmatprep.subr.mxu0 0.0
    %257 = vmatpush1.msra.mxu0 0.0
    %258 = vmatprep.subr.mxu0 0.0
    %259 = vmatpush1.msra.mxu0 0.0
    %260 = vmatprep.subr.mxu0 0.0
    %261 = vmatpush1.msra.mxu0 0.0
    %262 = vmatprep.mubr.f32.mxu0 0.0
    %263 = vmatmul.mubr.f32.gmra.mrb[0].mxu0 %v193
    %v264 = vpop.f32.mrb[0].mxu0
    %v265 = vadd.f32 0.0, %v264
    %v266 = vpop.f32.mrb[0].mxu0
    %v267 = vadd.f32 0.0, %v266
    %268 = vmatprep.mubr.f32.mxu0 0.0
    %269 = vmatmul.mubr.f32.gmra.mrb[0].mxu0 %v196
    %v270 = vpop.f32.mrb[0].mxu0
    %v271 = vadd.f32 0.0, %v270
    %v272 = vpop.f32.mrb[0].mxu0
    %v273 = vadd.f32 0.0, %v272
    %274 = vdwg.mxu0
    %v275 = vadd.f32 %v265, %v267
    %276 = vadd.xlane.f32.xlu0 %v275
    %v277 = vpop.xlane.xlu0 %276
    %v278 = vadd.f32 %v271, %v273
    %279 = vadd.xlane.f32.xlu0 %v278
    %v280 = vpop.xlane.xlu0 %279
    %v281 = vrcp.pop 256.0
    %v282 = vmul.f32 %v277, %v281
    %v283 = vmul.f32 %v280, %v281
    %v284 = vsub.f32 %v265, %v282
    %v285 = vsub.f32 %v267, %v282
    %v286 = vsub.f32 %v271, %v283
    %v287 = vsub.f32 %v273, %v283
    %v288 = vmul.f32 %v284, %v284
    %v289 = vmul.f32 %v285, %v285
    %v290 = vmul.f32 %v286, %v286
    %v291 = vmul.f32 %v287, %v287
    %v292 = vadd.f32 %v288, %v289
    %293 = vadd.xlane.f32.xlu0 %v292
    %v294 = vpop.xlane.xlu0 %293
    %v295 = vadd.f32 %v290, %v291
    %296 = vadd.xlane.f32.xlu0 %v295
    %v297 = vpop.xlane.xlu0 %296
    %v298 = vmul.f32 %v294, %v281
    %v299 = vmul.f32 %v297, %v281
    %v300 = vadd.f32 %v298, 1e-05
    %v301 = vadd.f32 %v299, 1e-05
    %v302 = vrsqrt.pop %v300
    %v303 = vrsqrt.pop %v301
    %v304 = vmul.f32 %v284, %v302
    %v305 = vmul.f32 %v285, %v302
    %v306 = vmul.f32 %v286, %v303
    %v307 = vmul.f32 %v287, %v303
    %v308 = vmax.f32 %v304, 0.0
    %v309 = vmax.f32 %v305, 0.0
    %v310 = vmax.f32 %v306, 0.0
    %v311 = vmax.f32 %v307, 0.0
    %312 = vst [vmem:[#allocation9] sm:$0xff] %v308
    %313 = vst [vmem:[#allocation9 + $0x8] sm:$0xff] %v309
    %314 = vst [vmem:[#allocation9 + $0x10] sm:$0xff] %v310
    %315 = vst [vmem:[#allocation9 + $0x18] sm:$0xff] %v311
    // Predicated region
    $region26: #{tpu_custom_call.1} parent=1 // pred_check
      _
    $region27: #{tpu_custom_call.1} parent=1 // pred_check_branch
      %317 = sbr.rel (0) target = $region29
    $region28: #{tpu_custom_call.1} parent=1 // pred_region
      %s319 = ssub.s32 512, 512
      %320 = vsyncadd [#allocation5], %s319
      %s321 = sshll.u32 [#allocation9], 4
      %s322 = int_to_ptr.vmem [resolvable:$true] %s321
      %327 = dma.vmem_to_hbm [thread:$0]  %s322, 512, %s3, [#allocation5], 256, 256, 16
    $region29: #{tpu_custom_call.1} parent=1 // pred_fallthru
      _
    // Predicated region
    $region30: #{tpu_custom_call.1} parent=1 // pred_check
      _
    $region31: #{tpu_custom_call.1} parent=1 // pred_check_branch
      %329 = sbr.rel (0) target = $region33
    $region32: #{tpu_custom_call.1} parent=1 // pred_region
      %330 = dma.done [#allocation5], 512
    $region33: #{tpu_custom_call.1} parent=1 // pred_fallthru
      _
    %331 = vsyncpa [#allocation4], 1
    %332 = vsyncpa [#allocation7], 1
    %333 = vsyncpa [#allocation5], 1

</llo_original>
